<compile_context>
chip_gen: v7x
topology: tpu7x:2x2x1
jax: 0.10.0
libtpu: 0.0.40
codegen_flags: <defaults>
</compile_context>

<pallas_src>
import jax
import jax.numpy as jnp
from jax.experimental import pallas as pl
from jax.experimental.pallas import tpu as pltpu


def _round_up(x, m):
    return pl.cdiv(x, m) * m


def mlp_kernel(x_ref, w1_ref, b1_ref, w2_ref, b2_ref, w3_ref, b3_ref, o_ref):
    """out = relu(relu(x @ W1 + b1) @ W2' + b2') . w3_row + b3'
    where W2'/b2'/w3_row/b3' already have the FiLM conditioning folded in."""
    x = x_ref[...]

    h1 = jnp.dot(x, w1_ref[...], preferred_element_type=jnp.float32) + b1_ref[...]
    h1 = jnp.maximum(h1, 0.0)

    h2 = jnp.dot(h1, w2_ref[...], preferred_element_type=jnp.float32) + b2_ref[...]
    h2 = jnp.maximum(h2, 0.0)

    # Final layer has out_features == 1: lane reduction (VPU mul + XLU reduce) instead
    # of an MXU matmul filling a 128/256-wide result tile for a single column.
    o_ref[...] = jnp.sum(h2 * w3_ref[...], axis=-1, keepdims=True) + b3_ref[...]


def prepare_params(params, dim):
    """Fold FiLM scale/shift into the next linear layer and pad features to lane width.

    (h * s + t) @ W + b == h @ (W * s.T) + (b + t @ W)
    """
    (w1, b1, s1, t1, w2, b2, s2, t2, w3, b3) = params
    w2f = w2 * s1.T                     # (2d, d), row-scaled by cond-1 gamma
    b2f = b2 + t1 @ w2                  # (1, d)
    w3f = (w3 * s2.T).T                 # (1, d), row form for the lane reduction
    b3f = b3 + t2 @ w3                  # (1, 1)

    dp = _round_up(dim, 128)            # padded in-feature dim
    hp = _round_up(2 * dim, 128)        # padded hidden dim
    w1p = jnp.pad(w1, ((0, dp - dim), (0, hp - 2 * dim)))
    b1p = jnp.pad(b1, ((0, 0), (0, hp - 2 * dim)))
    w2p = jnp.pad(w2f, ((0, hp - 2 * dim), (0, dp - dim)))
    b2p = jnp.pad(b2f, ((0, 0), (0, dp - dim)))
    w3p = jnp.pad(w3f, ((0, 0), (0, dp - dim)))
    return (w1p, b1p, w2p, b2p, w3p, b3f)


def mlp_forward(x, prepared):
    (w1p, b1p, w2p, b2p, w3p, b3f) = prepared
    B, dim = x.shape
    dp, hp = w1p.shape

    # Batch tile: large (1024-row) tiles to amortize ~0.35us/step grid overhead for big
    # batches; a single 8-aligned tile for tiny demo batches.  VMEM per step stays small
    # (x tile double-buffered: 2 * tile_b * dp * 4 bytes).
    tile_b = max(8, min(1024, _round_up(B, 8)))
    bp = _round_up(B, tile_b)
    xp = jnp.pad(x, ((0, bp - B), (0, dp - dim)))

    out = pl.pallas_call(
        mlp_kernel,
        out_shape=jax.ShapeDtypeStruct((bp, 1), jnp.float32),
        grid=(bp // tile_b,),
        in_specs=[
            pl.BlockSpec((tile_b, dp), lambda i: (i, 0)),   # x: tiled over batch
            pl.BlockSpec((dp, hp), lambda i: (0, 0)),       # W1: VMEM-resident
            pl.BlockSpec((1, hp), lambda i: (0, 0)),        # b1
            pl.BlockSpec((hp, dp), lambda i: (0, 0)),       # W2' (FiLM-folded)
            pl.BlockSpec((1, dp), lambda i: (0, 0)),        # b2'
            pl.BlockSpec((1, dp), lambda i: (0, 0)),        # w3 row (FiLM-folded)
            pl.BlockSpec((1, 1), lambda i: (0, 0)),         # b3'
        ],
        out_specs=pl.BlockSpec((tile_b, 1), lambda i: (i, 0)),
        compiler_params=pltpu.CompilerParams(
            dimension_semantics=("parallel",),              # megacore on v7x
            vmem_limit_bytes=64 * 1024 * 1024,
        ),
    )(xp, w1p, b1p, w2p, b2p, w3p, b3f)
    return out[:B]


def mlp_reference(x, params):
    """Unfused reference matching the PyTorch module: Linear+ReLU, cond_fn, Linear+ReLU,
    cond_fn, Linear.  cond_fns modeled as FiLM scale/shift (classifier-free guidance)."""
    (w1, b1, s1, t1, w2, b2, s2, t2, w3, b3) = params
    h1 = jnp.maximum(x @ w1 + b1, 0.0) * s1 + t1
    h2 = jnp.maximum(h1 @ w2 + b2, 0.0) * s2 + t2
    return h2 @ w3 + b3


def init_params(key, dim):
    ks = jax.random.split(key, 10)
    scale1 = 1.0 / jnp.sqrt(dim)
    scale2 = 1.0 / jnp.sqrt(2 * dim)
    # Linear weights stored as (in, out) == PyTorch weight.T ; biases as (1, out).
    w1 = jax.random.uniform(ks[0], (dim, 2 * dim), jnp.float32, -scale1, scale1)
    b1 = jax.random.uniform(ks[1], (1, 2 * dim), jnp.float32, -scale1, scale1)
    w2 = jax.random.uniform(ks[2], (2 * dim, dim), jnp.float32, -scale2, scale2)
    b2 = jax.random.uniform(ks[3], (1, dim), jnp.float32, -scale2, scale2)
    w3 = jax.random.uniform(ks[4], (dim, 1), jnp.float32, -scale2, scale2)
    b3 = jax.random.uniform(ks[5], (1, 1), jnp.float32, -scale2, scale2)
    # cond_fns modeled as FiLM conditioning (per-feature gamma/beta derived from a text
    # embedding); deterministic synthetic values here.
    s1 = 1.0 + 0.1 * jax.random.normal(ks[6], (1, 2 * dim), jnp.float32)
    t1 = 0.1 * jax.random.normal(ks[7], (1, 2 * dim), jnp.float32)
    s2 = 1.0 + 0.1 * jax.random.normal(ks[8], (1, dim), jnp.float32)
    t2 = 0.1 * jax.random.normal(ks[9], (1, dim), jnp.float32)
    return (w1, b1, s1, t1, w2, b2, s2, t2, w3, b3)


if __name__ == "__main__":
    dim = 32
    batch = 8
    key = jax.random.PRNGKey(0)
    kx, kp = jax.random.split(key)
    x = jax.random.normal(kx, (batch, dim), jnp.float32)
    params = init_params(kp, dim)

    prepared = prepare_params(params, dim)   # one-time fold + pad (wrapper-side)
    out = mlp_forward(x, prepared)
    out = jax.block_until_ready(out)

    ref = mlp_reference(x, params)
    assert out.shape == (batch, 1)
    assert jnp.allclose(out, ref, atol=1e-4, rtol=1e-4)
    print("KERNEL_OK")
</pallas_src>

<mosaic_0001>
module attributes {stable_mosaic.version = 11 : i64} {
  func.func @mlp_kernel(%arg0: i32, %arg1: memref<8x128xf32, #tpu.memory_space<vmem>>, %arg2: memref<128x128xf32, #tpu.memory_space<vmem>>, %arg3: memref<1x128xf32, #tpu.memory_space<vmem>>, %arg4: memref<128x128xf32, #tpu.memory_space<vmem>>, %arg5: memref<1x128xf32, #tpu.memory_space<vmem>>, %arg6: memref<1x128xf32, #tpu.memory_space<vmem>>, %arg7: memref<1x1xf32, #tpu.memory_space<vmem>>, %arg8: memref<8x1xf32, #tpu.memory_space<vmem>>) attributes {dimension_semantics = [#tpu.dimension_semantics<parallel>], iteration_bounds = array<i64: 1>, scalar_prefetch = 0 : i64, scratch_operands = 0 : i64, tpu.core_type = #tpu.core_type<tc>, window_params = [{transform_indices = @transform_0, window_bounds = array<i64: 8, 128>}, {pipeline_mode = #tpu.pipeline_mode<synchronous>, transform_indices = @transform_1, window_bounds = array<i64: 128, 128>}, {pipeline_mode = #tpu.pipeline_mode<synchronous>, transform_indices = @transform_2, window_bounds = array<i64: 1, 128>}, {pipeline_mode = #tpu.pipeline_mode<synchronous>, transform_indices = @transform_3, window_bounds = array<i64: 128, 128>}, {pipeline_mode = #tpu.pipeline_mode<synchronous>, transform_indices = @transform_4, window_bounds = array<i64: 1, 128>}, {pipeline_mode = #tpu.pipeline_mode<synchronous>, transform_indices = @transform_5, window_bounds = array<i64: 1, 128>}, {pipeline_mode = #tpu.pipeline_mode<synchronous>, transform_indices = @transform_6, window_bounds = array<i64: 1, 1>}, {transform_indices = @transform_7, window_bounds = array<i64: 8, 1>}]} {
    %c0 = arith.constant 0 : index
    %c0_0 = arith.constant 0 : index
    %0 = vector.load %arg1[%c0, %c0_0] : memref<8x128xf32, #tpu.memory_space<vmem>>, vector<8x128xf32>
    %c0_1 = arith.constant 0 : index
    %c0_2 = arith.constant 0 : index
    %1 = vector.load %arg2[%c0_1, %c0_2] : memref<128x128xf32, #tpu.memory_space<vmem>>, vector<128x128xf32>
    %cst = arith.constant dense<0.000000e+00> : vector<8x128xf32>
    %2 = tpu.matmul %0, %1, %cst {dimension_numbers = #tpu.dot_dimension_numbers<[1], [0], [0], [1], [0, 0, 1, 1], [], []>} : vector<8x128xf32>, vector<128x128xf32>, vector<8x128xf32> -> vector<8x128xf32>
    %c0_3 = arith.constant 0 : index
    %c0_4 = arith.constant 0 : index
    %3 = vector.load %arg3[%c0_3, %c0_4] : memref<1x128xf32, #tpu.memory_space<vmem>>, vector<1x128xf32>
    %4 = vector.broadcast %3 : vector<1x128xf32> to vector<8x128xf32>
    %5 = arith.addf %2, %4 : vector<8x128xf32>
    %cst_5 = arith.constant 0.000000e+00 : f32
    %6 = vector.broadcast %cst_5 : f32 to vector<8x128xf32>
    %7 = arith.maximumf %5, %6 : vector<8x128xf32>
    %c0_6 = arith.constant 0 : index
    %c0_7 = arith.constant 0 : index
    %8 = vector.load %arg4[%c0_6, %c0_7] : memref<128x128xf32, #tpu.memory_space<vmem>>, vector<128x128xf32>
    %cst_8 = arith.constant dense<0.000000e+00> : vector<8x128xf32>
    %9 = tpu.matmul %7, %8, %cst_8 {dimension_numbers = #tpu.dot_dimension_numbers<[1], [0], [0], [1], [0, 0, 1, 1], [], []>} : vector<8x128xf32>, vector<128x128xf32>, vector<8x128xf32> -> vector<8x128xf32>
    %c0_9 = arith.constant 0 : index
    %c0_10 = arith.constant 0 : index
    %10 = vector.load %arg5[%c0_9, %c0_10] : memref<1x128xf32, #tpu.memory_space<vmem>>, vector<1x128xf32>
    %11 = vector.broadcast %10 : vector<1x128xf32> to vector<8x128xf32>
    %12 = arith.addf %9, %11 : vector<8x128xf32>
    %cst_11 = arith.constant 0.000000e+00 : f32
    %13 = vector.broadcast %cst_11 : f32 to vector<8x128xf32>
    %14 = arith.maximumf %12, %13 : vector<8x128xf32>
    %c0_12 = arith.constant 0 : index
    %c0_13 = arith.constant 0 : index
    %15 = vector.load %arg6[%c0_12, %c0_13] : memref<1x128xf32, #tpu.memory_space<vmem>>, vector<1x128xf32>
    %16 = vector.broadcast %15 : vector<1x128xf32> to vector<8x128xf32>
    %17 = arith.mulf %14, %16 : vector<8x128xf32>
    %cst_14 = arith.constant dense<0.000000e+00> : vector<8xf32>
    %18 = vector.multi_reduction <add>, %17, %cst_14 [1] : vector<8x128xf32> to vector<8xf32>
    %19 = vector.shape_cast %18 : vector<8xf32> to vector<8x1xf32>
    %c0_15 = arith.constant 0 : index
    %c0_16 = arith.constant 0 : index
    %20 = vector.load %arg7[%c0_15, %c0_16] : memref<1x1xf32, #tpu.memory_space<vmem>>, vector<1x1xf32>
    %21 = vector.broadcast %20 : vector<1x1xf32> to vector<8x1xf32>
    %22 = arith.addf %19, %21 : vector<8x1xf32>
    %c0_17 = arith.constant 0 : index
    %c0_18 = arith.constant 0 : index
    %23 = vector.load %arg8[%c0_17, %c0_18] : memref<8x1xf32, #tpu.memory_space<vmem>>, vector<8x1xf32>
    tpu.vector_store %arg8[%c0_17, %c0_18], %22 {strides = array<i32>} : memref<8x1xf32, #tpu.memory_space<vmem>>, vector<8x1xf32>,
    return
  }
  func.func @transform_0(%arg0: i32) -> (i32, i32) {
    %c0_i32 = arith.constant 0 : i32
    %c0_i32_0 = arith.constant 0 : i32
    return %arg0, %c0_i32 : i32, i32
  }
  func.func @transform_1(%arg0: i32) -> (i32, i32) {
    %c0_i32 = arith.constant 0 : i32
    %c0_i32_0 = arith.constant 0 : i32
    %c0_i32_1 = arith.constant 0 : i32
    return %c0_i32, %c0_i32_0 : i32, i32
  }
  func.func @transform_2(%arg0: i32) -> (i32, i32) {
    %c0_i32 = arith.constant 0 : i32
    %c0_i32_0 = arith.constant 0 : i32
    %c0_i32_1 = arith.constant 0 : i32
    return %c0_i32, %c0_i32_0 : i32, i32
  }
  func.func @transform_3(%arg0: i32) -> (i32, i32) {
    %c0_i32 = arith.constant 0 : i32
    %c0_i32_0 = arith.constant 0 : i32
    %c0_i32_1 = arith.constant 0 : i32
    return %c0_i32, %c0_i32_0 : i32, i32
  }
  func.func @transform_4(%arg0: i32) -> (i32, i32) {
    %c0_i32 = arith.constant 0 : i32
    %c0_i32_0 = arith.constant 0 : i32
    %c0_i32_1 = arith.constant 0 : i32
    return %c0_i32, %c0_i32_0 : i32, i32
  }
  func.func @transform_5(%arg0: i32) -> (i32, i32) {
    %c0_i32 = arith.constant 0 : i32
    %c0_i32_0 = arith.constant 0 : i32
    %c0_i32_1 = arith.constant 0 : i32
    return %c0_i32, %c0_i32_0 : i32, i32
  }
  func.func @transform_6(%arg0: i32) -> (i32, i32) {
    %c0_i32 = arith.constant 0 : i32
    %c0_i32_0 = arith.constant 0 : i32
    %c0_i32_1 = arith.constant 0 : i32
    return %c0_i32, %c0_i32_0 : i32, i32
  }
  func.func @transform_7(%arg0: i32) -> (i32, i32) {
    %c0_i32 = arith.constant 0 : i32
    %c0_i32_0 = arith.constant 0 : i32
    return %arg0, %c0_i32 : i32, i32
  }
}

</mosaic_0001>

<llo_original>
// kernel: tpu_custom_call.1
$region0: #{tpu_custom_call.1}
  #allocation0 [shape = 'u32[]', space=smem, size = 0x4, offset = 0x4, fixed_abs, tag = 'smem constant byte address 0x4 - core index']
  #allocation1 [shape = 'u32[144,128]{1,0:T(1,128)}', space=vmem, size = 0x12000, scoped, tag = 'internal scratch']
  #allocation2 [shape = 'f32[1,1]{1,0:T(1,128)S(1)}', space=vmem, size = 0x200, scoped, tag = 'scoped memory for tpu_custom_call.1']
  %s0 = inlined_call_operand.hbm [shape: f32[8,128], index: 0, kind: input, shape index: {}]
  %s1 = inlined_call_operand.hbm [shape: f32[128,128], index: 1, kind: input, shape index: {}]
  %s2 = inlined_call_operand.hbm [shape: f32[1,128], index: 2, kind: input, shape index: {}]
  %s3 = inlined_call_operand.hbm [shape: f32[128,128], index: 3, kind: input, shape index: {}]
  %s4 = inlined_call_operand.hbm [shape: f32[1,128], index: 4, kind: input, shape index: {}]
  %s5 = inlined_call_operand.hbm [shape: f32[1,128], index: 5, kind: input, shape index: {}]
  %s6 = inlined_call_operand.<no memory space> [shape: f32[1,1], index: 6, kind: input, shape index: {}]
  %s7 = inlined_call_operand.hbm [shape: f32[8,1], index: 7, kind: output, shape index: {}]
  %s8 = sld [smem:[#allocation0]]
  $region62: #{tpu_custom_call.1} parent=0
    _
  %s10 = ssub.s32 1, %s8
  %s11 = scalar_select 0, %s10, %s8
  %v12 = vstv %s6
  %13 = vst [vmem:[#allocation2] sm:$0x1] %v12
  $region1: #{tpu_custom_call.1} parent=0
    #allocation3 [shape = 'u8[4096]{0}', space=vmem, size = 0x1000, scoped, tag = 'input window, operand 0, single buffered']
    #allocation4 [shape = 's32[1]{0}', space=sflag, size = 0x4, scoped, tag = 'scoped memory for tpu_custom_call.1']
    #allocation5 [shape = 's32[1]{0}', space=sflag, size = 0x4, scoped, tag = 'scoped memory for tpu_custom_call.1']
    #allocation6 [shape = 'u8[65536]{0}', space=vmem, size = 0x10000, scoped, tag = 'input window, operand 1, single buffered']
    #allocation7 [shape = 's32[1]{0}', space=sflag, size = 0x4, scoped, tag = 'scoped memory for tpu_custom_call.1']
    #allocation8 [shape = 'u8[512]{0}', space=vmem, size = 0x400, scoped, tag = 'input window, operand 2, single buffered']
    #allocation9 [shape = 'u8[65536]{0}', space=vmem, size = 0x10000, scoped, tag = 'input window, operand 3, single buffered']
    #allocation10 [shape = 's32[1]{0}', space=sflag, size = 0x4, scoped, tag = 'scoped memory for tpu_custom_call.1']
    #allocation11 [shape = 'u8[512]{0}', space=vmem, size = 0x400, scoped, tag = 'input window, operand 4, single buffered']
    #allocation12 [shape = 'u8[512]{0}', space=vmem, size = 0x400, scoped, tag = 'input window, operand 5, single buffered']
    #allocation13 [shape = 's32[1]{0}', space=sflag, size = 0x4, scoped, tag = 'scoped memory for tpu_custom_call.1']
    #allocation14 [shape = 'u8[4096]{0}', space=vmem, size = 0x1000, scoped, tag = 'output window, operand 0, single buffered']
    %14 = vsyncpa [#allocation4], 0
    %15 = vsyncpa [#allocation7], 0
    %16 = vsyncpa [#allocation10], 0
    %17 = vsyncpa [#allocation13], 0
    %18 = vsyncpa [#allocation5], 0
    // Predicated region
    $region2: #{tpu_custom_call.1} parent=1 // pred_check
      _
    $region3: #{tpu_custom_call.1} parent=1 // pred_check_branch
      %20 = sbr.rel (0) target = $region5
    $region4: #{tpu_custom_call.1} parent=1 // pred_region
      %s22 = ssub.s32 128, 128
      %23 = vsyncadd [#allocation4], %s22
      %s25 = sshll.u32 [#allocation3], 4
      %s26 = int_to_ptr.vmem [resolvable:$true] %s25
      %28 = dma.hbm_to_vmem [thread:$0]  %s0, 128, %s26, [#allocation4]
    $region5: #{tpu_custom_call.1} parent=1 // pred_fallthru
      _
    // Predicated region
    $region6: #{tpu_custom_call.1} parent=1 // pred_check
      _
    $region7: #{tpu_custom_call.1} parent=1 // pred_check_branch
      %30 = sbr.rel (0) target = $region9
    $region8: #{tpu_custom_call.1} parent=1 // pred_region
      %s32 = ssub.s32 2048, 2048
      %33 = vsyncadd [#allocation7], %s32
      %s34 = sshll.u32 [#allocation6], 4
      %s35 = int_to_ptr.vmem [resolvable:$true] %s34
      %40 = dma.hbm_to_vmem [thread:$0]  %s1, 2048, %s35, [#allocation7], 128, 128, 8
    $region9: #{tpu_custom_call.1} parent=1 // pred_fallthru
      _
    // Predicated region
    $region10: #{tpu_custom_call.1} parent=1 // pred_check
      _
    $region11: #{tpu_custom_call.1} parent=1 // pred_check_branch
      %42 = sbr.rel (0) target = $region13
    $region12: #{tpu_custom_call.1} parent=1 // pred_region
      %s44 = ssub.s32 16, 16
      %45 = vsyncadd [#allocation7], %s44
      %s47 = sshll.u32 [#allocation8], 4
      %s48 = int_to_ptr.vmem [resolvable:$true] %s47
      %50 = dma.hbm_to_vmem [thread:$0]  %s2, 16, %s48, [#allocation7]
    $region13: #{tpu_custom_call.1} parent=1 // pred_fallthru
      _
    // Predicated region
    $region14: #{tpu_custom_call.1} parent=1 // pred_check
      _
    $region15: #{tpu_custom_call.1} parent=1 // pred_check_branch
      %52 = sbr.rel (0) target = $region17
    $region16: #{tpu_custom_call.1} parent=1 // pred_region
      %s54 = ssub.s32 2048, 2048
      %55 = vsyncadd [#allocation10], %s54
      %s56 = sshll.u32 [#allocation9], 4
      %s57 = int_to_ptr.vmem [resolvable:$true] %s56
      %62 = dma.hbm_to_vmem [thread:$0]  %s3, 2048, %s57, [#allocation10], 128, 128, 8
    $region17: #{tpu_custom_call.1} parent=1 // pred_fallthru
      _
    // Predicated region
    $region18: #{tpu_custom_call.1} parent=1 // pred_check
      _
    $region19: #{tpu_custom_call.1} parent=1 // pred_check_branch
      %64 = sbr.rel (0) target = $region21
    $region20: #{tpu_custom_call.1} parent=1 // pred_region
      %s66 = ssub.s32 16, 16
      %67 = vsyncadd [#allocation10], %s66
      %s69 = sshll.u32 [#allocation11], 4
      %s70 = int_to_ptr.vmem [resolvable:$true] %s69
      %72 = dma.hbm_to_vmem [thread:$0]  %s4, 16, %s70, [#allocation10]
    $region21: #{tpu_custom_call.1} parent=1 // pred_fallthru
      _
    // Predicated region
    $region22: #{tpu_custom_call.1} parent=1 // pred_check
      _
    $region23: #{tpu_custom_call.1} parent=1 // pred_check_branch
      %74 = sbr.rel (0) target = $region25
    $region24: #{tpu_custom_call.1} parent=1 // pred_region
      %s76 = ssub.s32 16, 16
      %77 = vsyncadd [#allocation13], %s76
      %s79 = sshll.u32 [#allocation12], 4
      %s80 = int_to_ptr.vmem [resolvable:$true] %s79
      %82 = dma.hbm_to_vmem [thread:$0]  %s5, 16, %s80, [#allocation13]
    $region25: #{tpu_custom_call.1} parent=1 // pred_fallthru
      _
    // Predicated region
    $region26: #{tpu_custom_call.1} parent=1 // pred_check
      _
    $region27: #{tpu_custom_call.1} parent=1 // pred_check_branch
      %84 = sbr.rel (0) target = $region29
    $region28: #{tpu_custom_call.1} parent=1 // pred_region
      _
    $region29: #{tpu_custom_call.1} parent=1 // pred_fallthru
      _
    // Predicated region
    $region30: #{tpu_custom_call.1} parent=1 // pred_check
      _
    $region31: #{tpu_custom_call.1} parent=1 // pred_check_branch
      %86 = sbr.rel (0) target = $region33
    $region32: #{tpu_custom_call.1} parent=1 // pred_region
      %87 = dma.done [#allocation4], 128
    $region33: #{tpu_custom_call.1} parent=1 // pred_fallthru
      _
    // Predicated region
    $region34: #{tpu_custom_call.1} parent=1 // pred_check
      _
    $region35: #{tpu_custom_call.1} parent=1 // pred_check_branch
      %89 = sbr.rel (0) target = $region37
    $region36: #{tpu_custom_call.1} parent=1 // pred_region
      %90 = dma.done [#allocation7], 2048
    $region37: #{tpu_custom_call.1} parent=1 // pred_fallthru
      _
    // Predicated region
    $region38: #{tpu_custom_call.1} parent=1 // pred_check
      _
    $region39: #{tpu_custom_call.1} parent=1 // pred_check_branch
      %92 = sbr.rel (0) target = $region41
    $region40: #{tpu_custom_call.1} parent=1 // pred_region
      %93 = dma.done [#allocation7], 16
    $region41: #{tpu_custom_call.1} parent=1 // pred_fallthru
      _
    // Predicated region
    $region42: #{tpu_custom_call.1} parent=1 // pred_check
      _
    $region43: #{tpu_custom_call.1} parent=1 // pred_check_branch
      %95 = sbr.rel (0) target = $region45
    $region44: #{tpu_custom_call.1} parent=1 // pred_region
      %96 = dma.done [#allocation10], 2048
    $region45: #{tpu_custom_call.1} parent=1 // pred_fallthru
      _
    // Predicated region
    $region46: #{tpu_custom_call.1} parent=1 // pred_check
      _
    $region47: #{tpu_custom_call.1} parent=1 // pred_check_branch
      %98 = sbr.rel (0) target = $region49
    $region48: #{tpu_custom_call.1} parent=1 // pred_region
      %99 = dma.done [#allocation10], 16
    $region49: #{tpu_custom_call.1} parent=1 // pred_fallthru
      _
    // Predicated region
    $region50: #{tpu_custom_call.1} parent=1 // pred_check
      _
    $region51: #{tpu_custom_call.1} parent=1 // pred_check_branch
      %101 = sbr.rel (0) target = $region53
    $region52: #{tpu_custom_call.1} parent=1 // pred_region
      %102 = dma.done [#allocation13], 16
    $region53: #{tpu_custom_call.1} parent=1 // pred_fallthru
      _
    %v103 = vld [vmem:[#allocation3] sm:$0xff]
    %v104 = vld [vmem:[#allocation6] sm:$0xff]
    %v105 = vld [vmem:[#allocation6 + $0x8] sm:$0xff]
    %v106 = vld [vmem:[#allocation6 + $0x10] sm:$0xff]
    %v107 = vld [vmem:[#allocation6 + $0x18] sm:$0xff]
    %v108 = vld [vmem:[#allocation6 + $0x20] sm:$0xff]
    %v109 = vld [vmem:[#allocation6 + $0x28] sm:$0xff]
    %v110 = vld [vmem:[#allocation6 + $0x30] sm:$0xff]
    %v111 = vld [vmem:[#allocation6 + $0x38] sm:$0xff]
    %v112 = vld [vmem:[#allocation6 + $0x40] sm:$0xff]
    %v113 = vld [vmem:[#allocation6 + $0x48] sm:$0xff]
    %v114 = vld [vmem:[#allocation6 + $0x50] sm:$0xff]
    %v115 = vld [vmem:[#allocation6 + $0x58] sm:$0xff]
    %v116 = vld [vmem:[#allocation6 + $0x60] sm:$0xff]
    %v117 = vld [vmem:[#allocation6 + $0x68] sm:$0xff]
    %v118 = vld [vmem:[#allocation6 + $0x70] sm:$0xff]
    %v119 = vld [vmem:[#allocation6 + $0x78] sm:$0xff]
    %v120 = vld [vmem:[#allocation8] sm:$0x1]
    %v122 = vlaneseq
    %v123 = vshrl.u32 %v122, 7
    %v124 = vsub.s32 0, %v123
    %v125 = vrot.slane %v120, %v124
    %127 = vmatprep.subr.mxu0 0.0
    %128 = vmatpush1.msra.mxu0 %v104
    %129 = vmatprep.subr.mxu0 0.0
    %130 = vmatpush1.msra.mxu0 %v105
    %131 = vmatprep.subr.mxu0 0.0
    %132 = vmatpush1.msra.mxu0 %v106
    %133 = vmatprep.subr.mxu0 0.0
    %134 = vmatpush1.msra.mxu0 %v107
    %135 = vmatprep.subr.mxu0 0.0
    %136 = vmatpush1.msra.mxu0 %v108
    %137 = vmatprep.subr.mxu0 0.0
    %138 = vmatpush1.msra.mxu0 %v109
    %139 = vmatprep.subr.mxu0 0.0
    %140 = vmatpush1.msra.mxu0 %v110
    %141 = vmatprep.subr.mxu0 0.0
    %142 = vmatpush1.msra.mxu0 %v111
    %143 = vmatprep.subr.mxu0 0.0
    %144 = vmatpush1.msra.mxu0 %v112
    %145 = vmatprep.subr.mxu0 0.0
    %146 = vmatpush1.msra.mxu0 %v113
    %147 = vmatprep.subr.mxu0 0.0
    %148 = vmatpush1.msra.mxu0 %v114
    %149 = vmatprep.subr.mxu0 0.0
    %150 = vmatpush1.msra.mxu0 %v115
    %151 = vmatprep.subr.mxu0 0.0
    %152 = vmatpush1.msra.mxu0 %v116
    %153 = vmatprep.subr.mxu0 0.0
    %154 = vmatpush1.msra.mxu0 %v117
    %155 = vmatprep.subr.mxu0 0.0
    %156 = vmatpush1.msra.mxu0 %v118
    %157 = vmatprep.subr.mxu0 0.0
    %158 = vmatpush1.msra.mxu0 %v119
    %159 = vmatprep.subr.mxu0 0.0
    %160 = vmatpush1.msra.mxu0 0.0
    %161 = vmatprep.subr.mxu0 0.0
    %162 = vmatpush1.msra.mxu0 0.0
    %163 = vmatprep.subr.mxu0 0.0
    %164 = vmatpush1.msra.mxu0 0.0
    %165 = vmatprep.subr.mxu0 0.0
    %166 = vmatpush1.msra.mxu0 0.0
    %167 = vmatprep.subr.mxu0 0.0
    %168 = vmatpush1.msra.mxu0 0.0
    %169 = vmatprep.subr.mxu0 0.0
    %170 = vmatpush1.msra.mxu0 0.0
    %171 = vmatprep.subr.mxu0 0.0
    %172 = vmatpush1.msra.mxu0 0.0
    %173 = vmatprep.subr.mxu0 0.0
    %174 = vmatpush1.msra.mxu0 0.0
    %175 = vmatprep.subr.mxu0 0.0
    %176 = vmatpush1.msra.mxu0 0.0
    %177 = vmatprep.subr.mxu0 0.0
    %178 = vmatpush1.msra.mxu0 0.0
    %179 = vmatprep.subr.mxu0 0.0
    %180 = vmatpush1.msra.mxu0 0.0
    %181 = vmatprep.subr.mxu0 0.0
    %182 = vmatpush1.msra.mxu0 0.0
    %183 = vmatprep.subr.mxu0 0.0
    %184 = vmatpush1.msra.mxu0 0.0
    %185 = vmatprep.subr.mxu0 0.0
    %186 = vmatpush1.msra.mxu0 0.0
    %187 = vmatprep.subr.mxu0 0.0
    %188 = vmatpush1.msra.mxu0 0.0
    %189 = vmatprep.subr.mxu0 0.0
    %190 = vmatpush1.msra.mxu0 0.0
    %191 = vmatprep.mubr.f32.mxu0 0.0
    %192 = vmatmul.mubr.f32.gmra.mrb[0].mxu0 %v103
    %v193 = vpop.f32.mrb[0].mxu0
    %v194 = vadd.f32 %v125, %v193
    %v195 = vpop.f32.mrb[0].mxu0
    %196 = vdwg.mxu0
    %v197 = vmax.f32 %v194, 0.0
    %v198 = vld [vmem:[#allocation9] sm:$0xff]
    %v199 = vld [vmem:[#allocation9 + $0x8] sm:$0xff]
    %v200 = vld [vmem:[#allocation9 + $0x10] sm:$0xff]
    %v201 = vld [vmem:[#allocation9 + $0x18] sm:$0xff]
    %v202 = vld [vmem:[#allocation9 + $0x20] sm:$0xff]
    %v203 = vld [vmem:[#allocation9 + $0x28] sm:$0xff]
    %v204 = vld [vmem:[#allocation9 + $0x30] sm:$0xff]
    %v205 = vld [vmem:[#allocation9 + $0x38] sm:$0xff]
    %v206 = vld [vmem:[#allocation9 + $0x40] sm:$0xff]
    %v207 = vld [vmem:[#allocation9 + $0x48] sm:$0xff]
    %v208 = vld [vmem:[#allocation9 + $0x50] sm:$0xff]
    %v209 = vld [vmem:[#allocation9 + $0x58] sm:$0xff]
    %v210 = vld [vmem:[#allocation9 + $0x60] sm:$0xff]
    %v211 = vld [vmem:[#allocation9 + $0x68] sm:$0xff]
    %v212 = vld [vmem:[#allocation9 + $0x70] sm:$0xff]
    %v213 = vld [vmem:[#allocation9 + $0x78] sm:$0xff]
    %v214 = vld [vmem:[#allocation11] sm:$0x1]
    %v216 = vlaneseq
    %v217 = vshrl.u32 %v216, 7
    %v218 = vsub.s32 0, %v217
    %v219 = vrot.slane %v214, %v218
    %221 = vmatprep.subr.mxu0 0.0
    %222 = vmatpush1.msra.mxu0 %v198
    %223 = vmatprep.subr.mxu0 0.0
    %224 = vmatpush1.msra.mxu0 %v199
    %225 = vmatprep.subr.mxu0 0.0
    %226 = vmatpush1.msra.mxu0 %v200
    %227 = vmatprep.subr.mxu0 0.0
    %228 = vmatpush1.msra.mxu0 %v201
    %229 = vmatprep.subr.mxu0 0.0
    %230 = vmatpush1.msra.mxu0 %v202
    %231 = vmatprep.subr.mxu0 0.0
    %232 = vmatpush1.msra.mxu0 %v203
    %233 = vmatprep.subr.mxu0 0.0
    %234 = vmatpush1.msra.mxu0 %v204
    %235 = vmatprep.subr.mxu0 0.0
    %236 = vmatpush1.msra.mxu0 %v205
    %237 = vmatprep.subr.mxu0 0.0
    %238 = vmatpush1.msra.mxu0 %v206
    %239 = vmatprep.subr.mxu0 0.0
    %240 = vmatpush1.msra.mxu0 %v207
    %241 = vmatprep.subr.mxu0 0.0
    %242 = vmatpush1.msra.mxu0 %v208
    %243 = vmatprep.subr.mxu0 0.0
    %244 = vmatpush1.msra.mxu0 %v209
    %245 = vmatprep.subr.mxu0 0.0
    %246 = vmatpush1.msra.mxu0 %v210
    %247 = vmatprep.subr.mxu0 0.0
    %248 = vmatpush1.msra.mxu0 %v211
    %249 = vmatprep.subr.mxu0 0.0
    %250 = vmatpush1.msra.mxu0 %v212
    %251 = vmatprep.subr.mxu0 0.0
    %252 = vmatpush1.msra.mxu0 %v213
    %253 = vmatprep.subr.mxu0 0.0
    %254 = vmatpush1.msra.mxu0 0.0
    %255 = vmatprep.subr.mxu0 0.0
    %256 = vmatpush1.msra.mxu0 0.0
    %257 = vmatprep.subr.mxu0 0.0
    %258 = vmatpush1.msra.mxu0 0.0
    %259 = vmatprep.subr.mxu0 0.0
    %260 = vmatpush1.msra.mxu0 0.0
    %261 = vmatprep.subr.mxu0 0.0
    %262 = vmatpush1.msra.mxu0 0.0
    %263 = vmatprep.subr.mxu0 0.0
    %264 = vmatpush1.msra.mxu0 0.0
    %265 = vmatprep.subr.mxu0 0.0
    %266 = vmatpush1.msra.mxu0 0.0
    %267 = vmatprep.subr.mxu0 0.0
    %268 = vmatpush1.msra.mxu0 0.0
    %269 = vmatprep.subr.mxu0 0.0
    %270 = vmatpush1.msra.mxu0 0.0
    %271 = vmatprep.subr.mxu0 0.0
    %272 = vmatpush1.msra.mxu0 0.0
    %273 = vmatprep.subr.mxu0 0.0
    %274 = vmatpush1.msra.mxu0 0.0
    %275 = vmatprep.subr.mxu0 0.0
    %276 = vmatpush1.msra.mxu0 0.0
    %277 = vmatprep.subr.mxu0 0.0
    %278 = vmatpush1.msra.mxu0 0.0
    %279 = vmatprep.subr.mxu0 0.0
    %280 = vmatpush1.msra.mxu0 0.0
    %281 = vmatprep.subr.mxu0 0.0
    %282 = vmatpush1.msra.mxu0 0.0
    %283 = vmatprep.subr.mxu0 0.0
    %284 = vmatpush1.msra.mxu0 0.0
    %285 = vmatprep.mubr.f32.mxu0 0.0
    %286 = vmatmul.mubr.f32.gmra.mrb[0].mxu0 %v197
    %v287 = vpop.f32.mrb[0].mxu0
    %v288 = vadd.f32 %v219, %v287
    %v289 = vpop.f32.mrb[0].mxu0
    %290 = vdwg.mxu0
    %v291 = vmax.f32 %v288, 0.0
    %v292 = vld [vmem:[#allocation12] sm:$0x1]
    %v294 = vlaneseq
    %v295 = vshrl.u32 %v294, 7
    %v296 = vsub.s32 0, %v295
    %v297 = vrot.slane %v292, %v296
    %v299 = vmul.f32 %v291, %v297
    %300 = vadd.xlane.f32.xlu0 %v299
    %v301 = vpop.xlane.xlu0 %300
    %v302 = vld [vmem:[#allocation2] sm:$0x1]
    %v304 = vlaneseq
    %v305 = vshrl.u32 %v304, 7
    %v306 = vsub.s32 0, %v305
    %v307 = vrot.slane %v302, %v306
    %v309 = vadd.f32 %v301, %v307
    %vm310 = vcmask 7168
    %311 = vst.msk [vmem:[#allocation14] sm:$0xff] %vm310, %v309
    // Predicated region
    $region54: #{tpu_custom_call.1} parent=1 // pred_check
      _
    $region55: #{tpu_custom_call.1} parent=1 // pred_check_branch
      %313 = sbr.rel (0) target = $region57
    $region56: #{tpu_custom_call.1} parent=1 // pred_region
      %s315 = ssub.s32 128, 128
      %316 = vsyncadd [#allocation5], %s315
      %s318 = sshll.u32 [#allocation14], 4
      %s319 = int_to_ptr.vmem [resolvable:$true] %s318
      %321 = dma.vmem_to_hbm [thread:$0]  %s319, 128, %s7, [#allocation5]
    $region57: #{tpu_custom_call.1} parent=1 // pred_fallthru
      _
    // Predicated region
    $region58: #{tpu_custom_call.1} parent=1 // pred_check
      _
    $region59: #{tpu_custom_call.1} parent=1 // pred_check_branch
      %323 = sbr.rel (0) target = $region61
    $region60: #{tpu_custom_call.1} parent=1 // pred_region
      %324 = dma.done [#allocation5], 128
    $region61: #{tpu_custom_call.1} parent=1 // pred_fallthru
      _
    %325 = vsyncpa [#allocation4], 1
    %326 = vsyncpa [#allocation7], 1
    %327 = vsyncpa [#allocation10], 1
    %328 = vsyncpa [#allocation13], 1
    %329 = vsyncpa [#allocation5], 1

</llo_original>
